<compile_context>
chip_gen: v7x
topology: tpu7x:2x2x1
jax: 0.10.0
libtpu: 0.0.40
codegen_flags: <defaults>
</compile_context>

<pallas_src>
import jax
import jax.numpy as jnp
from jax.experimental import pallas as pl
from jax.experimental.pallas import tpu as pltpu

LANE = 128            # vreg lane width (same on v5e/v6e/v7x)
SUBLANE = 8           # vreg sublane count
MAX_TILE_ROWS = 2048  # 2048 * 128 * 4B = 1 MiB per f32 tile


def _bias_kernel(bias_ref, x_ref, o_ref):
    # bias_ref: SMEM scalar-prefetch ref, shape (1,)
    # x_ref / o_ref: (tile_rows, 128) VMEM tiles
    o_ref[...] = x_ref[...] + bias_ref[0]


def _round_up(a, b):
    return ((a + b - 1) // b) * b


def bias_forward(x, bias):
    """y = x + bias (scalar broadcast), matching Bias.forward."""
    orig_shape = x.shape
    out_dtype = jnp.result_type(x.dtype, bias.dtype)  # PyTorch-style promotion
    n = int(x.size)
    if n == 0:
        # Empty input: nothing to launch a kernel for.
        return x.astype(out_dtype)

    xf = x.reshape(-1)
    if xf.dtype != out_dtype:
        xf = xf.astype(out_dtype)
    b = bias.astype(out_dtype).reshape(1)

    # Lane-dense flattening: last dim = 128 lanes. Pad only to a multiple of
    # one (8, 128) vreg tile; the grid's partial last block is handled by
    # Pallas (OOB reads are don't-care, OOB writes are dropped).
    pad_unit = SUBLANE * LANE  # 1024 elements
    n_padded = _round_up(n, pad_unit)
    if n_padded != n:
        xf = jnp.pad(xf, (0, n_padded - n))
    rows = n_padded // LANE                     # multiple of SUBLANE
    tile_rows = min(rows, MAX_TILE_ROWS)        # multiple of SUBLANE
    x2d = xf.reshape(rows, LANE)

    grid = (pl.cdiv(rows, tile_rows),)

    out = pl.pallas_call(
        _bias_kernel,
        out_shape=jax.ShapeDtypeStruct((rows, LANE), out_dtype),
        grid_spec=pltpu.PrefetchScalarGridSpec(
            num_scalar_prefetch=1,  # bias lands in SMEM before the grid runs
            grid=grid,
            in_specs=[
                pl.BlockSpec((tile_rows, LANE), lambda i, bias_sc: (i, 0)),
            ],
            out_specs=pl.BlockSpec((tile_rows, LANE), lambda i, bias_sc: (i, 0)),
        ),
        compiler_params=pltpu.CompilerParams(
            # Independent row tiles: lets the row axis shard across
            # TensorCores on multi-TC parts; harmless on single-TC chips.
            dimension_semantics=("parallel",),
        ),
    )(b, x2d)

    return out.reshape(-1)[:n].reshape(orig_shape)


if __name__ == "__main__":
    key = jax.random.PRNGKey(0)
    # Small NCHW input consistent with typical conv-style usage.
    x = jax.random.normal(key, (2, 4, 16, 16), dtype=jnp.float32)

    # Deterministic parameter init, matching nn.Parameter(torch.zeros(1)).
    bias = jnp.zeros((1,), dtype=jnp.float32)

    y = bias_forward(x, bias)
    jax.block_until_ready(y)

    # Reference check (pure JAX broadcast add).
    ref = x + bias
    assert y.shape == x.shape and y.dtype == ref.dtype
    assert jnp.allclose(y, ref, atol=1e-6)

    # Non-zero bias to exercise the broadcast path.
    bias2 = jnp.array([0.5], dtype=jnp.float32)
    y2 = bias_forward(x, bias2)
    jax.block_until_ready(y2)
    assert jnp.allclose(y2, x + 0.5, atol=1e-6)

    # Ragged size (105 elements) to exercise the pad + partial-block path.
    x3 = jax.random.normal(jax.random.PRNGKey(1), (3, 5, 7), dtype=jnp.float32)
    y3 = bias_forward(x3, bias2)
    jax.block_until_ready(y3)
    assert y3.shape == x3.shape
    assert jnp.allclose(y3, x3 + 0.5, atol=1e-6)

    # Medium ragged size to exercise a multi-tile grid with a partial last
    # block (2600*130 = 338000 elems -> 2648 rows -> grid of 2, last partial).
    x4 = jax.random.normal(jax.random.PRNGKey(2), (2600, 130), dtype=jnp.float32)
    y4 = bias_forward(x4, bias2)
    jax.block_until_ready(y4)
    assert y4.shape == x4.shape
    assert jnp.allclose(y4, x4 + 0.5, atol=1e-6)

    print("KERNEL_OK")
</pallas_src>

<mosaic_0001>
module attributes {stable_mosaic.version = 11 : i64} {
  func.func @_bias_kernel(%arg0: i32, %arg1: memref<1xf32, #tpu.memory_space<smem>>, %arg2: memref<16x128xf32, #tpu.memory_space<vmem>>, %arg3: memref<16x128xf32, #tpu.memory_space<vmem>>) attributes {dimension_semantics = [#tpu.dimension_semantics<parallel>], iteration_bounds = array<i64: 1>, scalar_prefetch = 1 : i64, scratch_operands = 0 : i64, tpu.core_type = #tpu.core_type<tc>, window_params = [{transform_indices = @transform_0, window_bounds = array<i64: 16, 128>}, {transform_indices = @transform_1, window_bounds = array<i64: 16, 128>}]} {
    %c0 = arith.constant 0 : index
    %c0_0 = arith.constant 0 : index
    %0 = vector.load %arg2[%c0, %c0_0] : memref<16x128xf32, #tpu.memory_space<vmem>>, vector<16x128xf32>
    %c0_1 = arith.constant 0 : index
    %1 = memref.load %arg1[%c0_1] : memref<1xf32, #tpu.memory_space<smem>>
    %2 = vector.broadcast %1 : f32 to vector<16x128xf32>
    %3 = arith.addf %0, %2 : vector<16x128xf32>
    %c0_2 = arith.constant 0 : index
    %c0_3 = arith.constant 0 : index
    %4 = vector.load %arg3[%c0_2, %c0_3] : memref<16x128xf32, #tpu.memory_space<vmem>>, vector<16x128xf32>
    tpu.vector_store %arg3[%c0_2, %c0_3], %3 {strides = array<i32>} : memref<16x128xf32, #tpu.memory_space<vmem>>, vector<16x128xf32>,
    return
  }
  func.func @transform_0(%arg0: i32, %arg1: memref<1xf32, #tpu.memory_space<smem>>) -> (i32, i32) {
    %c0_i32 = arith.constant 0 : i32
    %c0_i32_0 = arith.constant 0 : i32
    return %arg0, %c0_i32 : i32, i32
  }
  func.func @transform_1(%arg0: i32, %arg1: memref<1xf32, #tpu.memory_space<smem>>) -> (i32, i32) {
    %c0_i32 = arith.constant 0 : i32
    %c0_i32_0 = arith.constant 0 : i32
    return %arg0, %c0_i32 : i32, i32
  }
}

</mosaic_0001>

<llo_original>
// kernel: tpu_custom_call.1
$region0: #{tpu_custom_call.1}
  #allocation0 [shape = 'u32[]', space=smem, size = 0x4, offset = 0x4, fixed_abs, tag = 'smem constant byte address 0x4 - core index']
  #allocation1 [shape = 'u32[144,128]{1,0:T(1,128)}', space=vmem, size = 0x12000, scoped, tag = 'internal scratch']
  #allocation2 [shape = 's32[1]{0}', space=sflag, size = 0x4, scoped, tag = 'scoped memory for tpu_custom_call.1']
  #allocation3 [shape = 'f32[1]{0:T(128)S(6)}', space=smem, size = 0x200, scoped, tag = 'prefetched SMEM operand 0']
  %s0 = inlined_call_operand.<no memory space> [shape: f32[1], index: 0, kind: input, shape index: {}]
  %s1 = inlined_call_operand.hbm [shape: f32[16,128], index: 1, kind: input, shape index: {}]
  %s2 = inlined_call_operand.hbm [shape: f32[16,128], index: 2, kind: output, shape index: {}]
  %s3 = sld [smem:[#allocation0]]
  $region18: #{tpu_custom_call.1} parent=0
    _
  %s5 = ssub.s32 1, %s3
  %s6 = scalar_select 0, %s5, %s3
  %7 = sst [smem:[#allocation3]] %s0
  $region1: #{tpu_custom_call.1} parent=0
    #allocation4 [shape = 'u8[8192]{0}', space=vmem, size = 0x2000, scoped, tag = 'input window, operand 1, single buffered']
    #allocation5 [shape = 's32[1]{0}', space=sflag, size = 0x4, scoped, tag = 'scoped memory for tpu_custom_call.1']
    #allocation6 [shape = 's32[1]{0}', space=sflag, size = 0x4, scoped, tag = 'scoped memory for tpu_custom_call.1']
    #allocation7 [shape = 'u8[8192]{0}', space=vmem, size = 0x2000, scoped, tag = 'output window, operand 0, single buffered']
    %8 = vsyncpa [#allocation5], 0
    %9 = vsyncpa [#allocation6], 0
    // Predicated region
    $region2: #{tpu_custom_call.1} parent=1 // pred_check
      _
    $region3: #{tpu_custom_call.1} parent=1 // pred_check_branch
      %11 = sbr.rel (0) target = $region5
    $region4: #{tpu_custom_call.1} parent=1 // pred_region
      %s13 = ssub.s32 256, 256
      %14 = vsyncadd [#allocation5], %s13
      %s15 = sshll.u32 [#allocation4], 4
      %s16 = int_to_ptr.vmem [resolvable:$true] %s15
      %21 = dma.hbm_to_vmem [thread:$0]  %s1, 256, %s16, [#allocation5], 128, 128, 8
    $region5: #{tpu_custom_call.1} parent=1 // pred_fallthru
      _
    // Predicated region
    $region6: #{tpu_custom_call.1} parent=1 // pred_check
      _
    $region7: #{tpu_custom_call.1} parent=1 // pred_check_branch
      %23 = sbr.rel (0) target = $region9
    $region8: #{tpu_custom_call.1} parent=1 // pred_region
      %24 = dma.done [#allocation5], 256
    $region9: #{tpu_custom_call.1} parent=1 // pred_fallthru
      _
    %v25 = vld [vmem:[#allocation4] sm:$0xff]
    %v26 = vld [vmem:[#allocation4 + $0x8] sm:$0xff]
    %s27 = sld [smem:[#allocation3]]
    %v28 = vstv %s27
    %v29 = vadd.f32 %v25, %v28
    %v30 = vadd.f32 %v26, %v28
    %31 = vst [vmem:[#allocation7] sm:$0xff] %v29
    %32 = vst [vmem:[#allocation7 + $0x8] sm:$0xff] %v30
    // Predicated region
    $region10: #{tpu_custom_call.1} parent=1 // pred_check
      _
    $region11: #{tpu_custom_call.1} parent=1 // pred_check_branch
      %34 = sbr.rel (0) target = $region13
    $region12: #{tpu_custom_call.1} parent=1 // pred_region
      %s36 = ssub.s32 256, 256
      %37 = vsyncadd [#allocation6], %s36
      %s38 = sshll.u32 [#allocation7], 4
      %s39 = int_to_ptr.vmem [resolvable:$true] %s38
      %44 = dma.vmem_to_hbm [thread:$0]  %s39, 256, %s2, [#allocation6], 128, 128, 8
    $region13: #{tpu_custom_call.1} parent=1 // pred_fallthru
      _
    // Predicated region
    $region14: #{tpu_custom_call.1} parent=1 // pred_check
      _
    $region15: #{tpu_custom_call.1} parent=1 // pred_check_branch
      %46 = sbr.rel (0) target = $region17
    $region16: #{tpu_custom_call.1} parent=1 // pred_region
      %47 = dma.done [#allocation6], 256
    $region17: #{tpu_custom_call.1} parent=1 // pred_fallthru
      _
    %48 = vsyncpa [#allocation5], 1
    %49 = vsyncpa [#allocation6], 1

</llo_original>
